<compile_context>
chip_gen: v5e
topology: v5e:2x2
jax: 0.10.0
libtpu: 0.0.40
codegen_flags: <defaults>
</compile_context>

<pallas_src>
import functools

import jax
import jax.numpy as jnp
from jax.experimental import pallas as pl
from jax.experimental.pallas import tpu as pltpu  # noqa: F401  (TPU backend)

LANE = 128          # lane-dense padded feature width
_BN_EPS = 1e-5


# ----------------------------- fused kernel ---------------------------------

def _fused_mlp_kernel(x_ref, w1_ref, b1_ref, g1_ref, be1_ref,
                      ws_ref, bs_ref, gs_ref, bes_ref,
                      wh_ref, bh_ref, o_ref, *, num_hidden):
    """Entire forward pass in one kernel invocation (single grid point).

    All params are VMEM resident; activations never leave VMEM/vregs.
    Padded feature lanes carry gamma=beta=0 and zero weights, so they stay 0.
    """

    def bn_relu(y, gamma, beta):
        # One-pass batch statistics (training-mode BN, biased variance).
        mean = jnp.mean(y, axis=0, keepdims=True)
        mean_sq = jnp.mean(y * y, axis=0, keepdims=True)
        var = jnp.maximum(mean_sq - mean * mean, 0.0)
        # Fold gamma * rsqrt(var+eps) into one scale/shift -> single FMA per elem.
        scale = gamma * jax.lax.rsqrt(var + _BN_EPS)
        shift = beta - mean * scale
        return jnp.maximum(y * scale + shift, 0.0)

    h = jnp.dot(x_ref[...], w1_ref[...], preferred_element_type=jnp.float32)
    h = bn_relu(h + b1_ref[...], g1_ref[...], be1_ref[...])

    for i in range(num_hidden):            # static unroll (num_hidden is small)
        y = jnp.dot(h, ws_ref[i], preferred_element_type=jnp.float32) + bs_ref[i]
        h = bn_relu(y, gs_ref[i], bes_ref[i])

    # Lane-padded head output (last dim = 128 -> unmasked stores); real columns
    # are sliced out in the wrapper.
    o_ref[...] = (
        jnp.dot(h, wh_ref[...], preferred_element_type=jnp.float32) + bh_ref[...]
    )


# ----------------------------- pallas wrapper --------------------------------

def _full_spec(shape):
    # whole-array VMEM block, single grid point
    return pl.BlockSpec(shape, lambda: (0,) * len(shape))


def _fused_forward(x, kp, head_w, head_b, num_hidden):
    B = x.shape[0]
    args = (x, kp["w1"], kp["b1"], kp["g1"], kp["be1"],
            kp["ws"], kp["bs"], kp["gs"], kp["bes"], head_w, head_b)
    kernel = functools.partial(_fused_mlp_kernel, num_hidden=num_hidden)
    return pl.pallas_call(
        kernel,
        out_shape=jax.ShapeDtypeStruct((B, LANE), jnp.float32),
        grid=(),
        in_specs=[_full_spec(a.shape) for a in args],
        out_specs=_full_spec((B, LANE)),
    )(*args)


# ----------------------------- parameters ------------------------------------

def init_params(key, param, num_hidden, n):
    """PyTorch-default-like init.

    Linear: weight (out,in) ~ U(-1/sqrt(in), 1/sqrt(in)); stored transposed
    (in, out).  BatchNorm1d: gamma=1, beta=0 (training-mode stats, eps=1e-5).
    """
    def lin(k, fan_in, fan_out):
        kw, kb = jax.random.split(k)
        bound = 1.0 / float(fan_in) ** 0.5
        w = jax.random.uniform(kw, (fan_in, fan_out), jnp.float32, -bound, bound)
        b = jax.random.uniform(kb, (1, fan_out), jnp.float32, -bound, bound)
        return w, b

    keys = jax.random.split(key, 3 + num_hidden)
    p = {
        "fc1": lin(keys[0], n, param),
        "bn1": (jnp.ones((1, param), jnp.float32),
                jnp.zeros((1, param), jnp.float32)),
        "fcs": [],
        "bns": [],
    }
    for i in range(num_hidden):
        p["fcs"].append(lin(keys[1 + i], param, param))
        p["bns"].append((jnp.ones((1, param), jnp.float32),
                         jnp.zeros((1, param), jnp.float32)))
    p["fc3"] = lin(keys[1 + num_hidden], param, 1)
    p["fc_pm"] = lin(keys[2 + num_hidden], param, 2)
    return p


def _pad2(a, rows, cols):
    return jnp.pad(a, ((0, rows - a.shape[0]), (0, cols - a.shape[1])))


def prepare_kernel_params(p, num_hidden, n):
    """Pad every tensor once to lane-dense (., 128) shapes and stack hidden layers."""
    w1, b1 = p["fc1"]
    g1, be1 = p["bn1"]
    kp = {
        "w1": _pad2(w1, n, LANE),       # padded out-cols are zero
        "b1": _pad2(b1, 1, LANE),
        "g1": _pad2(g1, 1, LANE),       # padded gamma/beta = 0 -> padded lanes stay 0
        "be1": _pad2(be1, 1, LANE),
    }
    if num_hidden > 0:
        kp["ws"] = jnp.stack([_pad2(w, LANE, LANE) for (w, _) in p["fcs"]])
        kp["bs"] = jnp.stack([_pad2(b, 1, LANE) for (_, b) in p["fcs"]])
        kp["gs"] = jnp.stack([_pad2(g, 1, LANE) for (g, _) in p["bns"]])
        kp["bes"] = jnp.stack([_pad2(be, 1, LANE) for (_, be) in p["bns"]])
    else:  # dummy buffers, never read (static loop trip count is 0)
        kp["ws"] = jnp.zeros((1, LANE, LANE), jnp.float32)
        kp["bs"] = jnp.zeros((1, 1, LANE), jnp.float32)
        kp["gs"] = jnp.zeros((1, 1, LANE), jnp.float32)
        kp["bes"] = jnp.zeros((1, 1, LANE), jnp.float32)
    kp["w3"] = _pad2(p["fc3"][0], LANE, LANE)
    kp["b3"] = _pad2(p["fc3"][1], 1, LANE)
    kp["w_pm"] = _pad2(p["fc_pm"][0], LANE, LANE)
    kp["b_pm"] = _pad2(p["fc_pm"][1], 1, LANE)
    return kp


# ----------------------------- model forward ---------------------------------

@functools.partial(jax.jit, static_argnames=("is_pm", "num_hidden"))
def my_model_forward(kparams, x, is_pm=1, *, num_hidden):
    if is_pm == 3:
        head_w, head_b, out_dim = kparams["w_pm"], kparams["b_pm"], 2
    else:
        head_w, head_b, out_dim = kparams["w3"], kparams["b3"], 1
    out_padded = _fused_forward(x, kparams, head_w, head_b, num_hidden)
    return out_padded[:, :out_dim]


# ----------------------------- pure-JAX reference ----------------------------

def reference_forward(p, x, is_pm=1):
    def bn(y, gamma, beta):
        mean = jnp.mean(y, axis=0, keepdims=True)
        var = jnp.mean((y - mean) ** 2, axis=0, keepdims=True)
        return (y - mean) * jax.lax.rsqrt(var + _BN_EPS) * gamma + beta

    w1, b1 = p["fc1"]
    g1, be1 = p["bn1"]
    h = jnp.maximum(bn(x @ w1 + b1, g1, be1), 0.0)
    for (w, b), (g, be) in zip(p["fcs"], p["bns"]):
        h = jnp.maximum(bn(h @ w + b, g, be), 0.0)
    w, b = p["fc_pm"] if is_pm == 3 else p["fc3"]
    return h @ w + b


# ----------------------------- main -------------------------------------------

if __name__ == "__main__":
    # Shapes consistent with the module: n=16 input features, param=32 hidden
    # width, num_hidden=2 hidden blocks, batch=8.
    param, num_hidden, n = 32, 2, 16
    batch = 8

    key = jax.random.PRNGKey(0)
    k_params, k_x = jax.random.split(key)
    raw_params = init_params(k_params, param, num_hidden, n)
    kparams = prepare_kernel_params(raw_params, num_hidden, n)
    x = jax.random.normal(k_x, (batch, n), jnp.float32)

    out = my_model_forward(kparams, x, is_pm=1, num_hidden=num_hidden)    # fc3 head
    out_pm = my_model_forward(kparams, x, is_pm=3, num_hidden=num_hidden) # fc_pm head
    jax.block_until_ready(out)
    jax.block_until_ready(out_pm)

    assert out.shape == (batch, 1)
    assert out_pm.shape == (batch, 2)

    # Numerical check against a pure-JAX reference (loose tolerance: MXU f32
    # matmul vs XLA default + one-pass vs two-pass variance).
    ref = reference_forward(raw_params, x, is_pm=1)
    ref_pm = reference_forward(raw_params, x, is_pm=3)
    assert jnp.allclose(out, ref, atol=1e-2, rtol=1e-2)
    assert jnp.allclose(out_pm, ref_pm, atol=1e-2, rtol=1e-2)
    assert bool(jnp.all(jnp.isfinite(out))) and bool(jnp.all(jnp.isfinite(out_pm)))

    print("KERNEL_OK")
</pallas_src>

<mosaic_0001>
module attributes {stable_mosaic.version = 11 : i64} {
  func.func @_fused_mlp_kernel(%arg0: memref<8x16xf32, #tpu.memory_space<vmem>>, %arg1: memref<16x128xf32, #tpu.memory_space<vmem>>, %arg2: memref<1x128xf32, #tpu.memory_space<vmem>>, %arg3: memref<1x128xf32, #tpu.memory_space<vmem>>, %arg4: memref<1x128xf32, #tpu.memory_space<vmem>>, %arg5: memref<2x128x128xf32, #tpu.memory_space<vmem>>, %arg6: memref<2x1x128xf32, #tpu.memory_space<vmem>>, %arg7: memref<2x1x128xf32, #tpu.memory_space<vmem>>, %arg8: memref<2x1x128xf32, #tpu.memory_space<vmem>>, %arg9: memref<128x128xf32, #tpu.memory_space<vmem>>, %arg10: memref<1x128xf32, #tpu.memory_space<vmem>>, %arg11: memref<8x128xf32, #tpu.memory_space<vmem>>) attributes {dimension_semantics = [], scalar_prefetch = 0 : i64, scratch_operands = 0 : i64, tpu.core_type = #tpu.core_type<tc>} {
    %c0 = arith.constant 0 : index
    %c0_0 = arith.constant 0 : index
    %0 = vector.load %arg0[%c0, %c0_0] : memref<8x16xf32, #tpu.memory_space<vmem>>, vector<8x16xf32>
    %c0_1 = arith.constant 0 : index
    %c0_2 = arith.constant 0 : index
    %1 = vector.load %arg1[%c0_1, %c0_2] : memref<16x128xf32, #tpu.memory_space<vmem>>, vector<16x128xf32>
    %cst = arith.constant dense<0.000000e+00> : vector<8x128xf32>
    %2 = tpu.matmul %0, %1, %cst {dimension_numbers = #tpu.dot_dimension_numbers<[1], [0], [0], [1], [0, 0, 1, 1], [], []>} : vector<8x16xf32>, vector<16x128xf32>, vector<8x128xf32> -> vector<8x128xf32>
    %c0_3 = arith.constant 0 : index
    %c0_4 = arith.constant 0 : index
    %3 = vector.load %arg2[%c0_3, %c0_4] : memref<1x128xf32, #tpu.memory_space<vmem>>, vector<1x128xf32>
    %4 = vector.broadcast %3 : vector<1x128xf32> to vector<8x128xf32>
    %5 = arith.addf %2, %4 : vector<8x128xf32>
    %c0_5 = arith.constant 0 : index
    %c0_6 = arith.constant 0 : index
    %6 = vector.load %arg3[%c0_5, %c0_6] : memref<1x128xf32, #tpu.memory_space<vmem>>, vector<1x128xf32>
    %c0_7 = arith.constant 0 : index
    %c0_8 = arith.constant 0 : index
    %7 = vector.load %arg4[%c0_7, %c0_8] : memref<1x128xf32, #tpu.memory_space<vmem>>, vector<1x128xf32>
    %cst_9 = arith.constant dense<0.000000e+00> : vector<128xf32>
    %8 = vector.multi_reduction <add>, %5, %cst_9 [0] : vector<8x128xf32> to vector<128xf32>
    %9 = vector.shape_cast %8 : vector<128xf32> to vector<1x128xf32>
    %cst_10 = arith.constant 8.000000e+00 : f32
    %10 = vector.broadcast %cst_10 : f32 to vector<1x128xf32>
    %11 = arith.divf %9, %10 : vector<1x128xf32>
    %12 = arith.mulf %5, %5 : vector<8x128xf32>
    %cst_11 = arith.constant dense<0.000000e+00> : vector<128xf32>
    %13 = vector.multi_reduction <add>, %12, %cst_11 [0] : vector<8x128xf32> to vector<128xf32>
    %14 = vector.shape_cast %13 : vector<128xf32> to vector<1x128xf32>
    %cst_12 = arith.constant 8.000000e+00 : f32
    %15 = vector.broadcast %cst_12 : f32 to vector<1x128xf32>
    %16 = arith.divf %14, %15 : vector<1x128xf32>
    %17 = arith.mulf %11, %11 : vector<1x128xf32>
    %18 = arith.subf %16, %17 : vector<1x128xf32>
    %cst_13 = arith.constant 0.000000e+00 : f32
    %19 = vector.broadcast %cst_13 : f32 to vector<1x128xf32>
    %20 = arith.maximumf %18, %19 : vector<1x128xf32>
    %cst_14 = arith.constant 9.99999974E-6 : f32
    %21 = vector.broadcast %cst_14 : f32 to vector<1x128xf32>
    %22 = arith.addf %20, %21 : vector<1x128xf32>
    %23 = math.rsqrt %22 : vector<1x128xf32>
    %24 = arith.mulf %6, %23 : vector<1x128xf32>
    %25 = arith.mulf %11, %24 : vector<1x128xf32>
    %26 = arith.subf %7, %25 : vector<1x128xf32>
    %27 = vector.broadcast %24 : vector<1x128xf32> to vector<8x128xf32>
    %28 = arith.mulf %5, %27 : vector<8x128xf32>
    %29 = vector.broadcast %26 : vector<1x128xf32> to vector<8x128xf32>
    %30 = arith.addf %28, %29 : vector<8x128xf32>
    %cst_15 = arith.constant 0.000000e+00 : f32
    %31 = vector.broadcast %cst_15 : f32 to vector<8x128xf32>
    %32 = arith.maximumf %30, %31 : vector<8x128xf32>
    %c0_16 = arith.constant 0 : index
    %c0_17 = arith.constant 0 : index
    %c0_18 = arith.constant 0 : index
    %33 = vector.load %arg5[%c0_16, %c0_17, %c0_18] : memref<2x128x128xf32, #tpu.memory_space<vmem>>, vector<1x128x128xf32>
    %34 = vector.shape_cast %33 : vector<1x128x128xf32> to vector<128x128xf32>
    %cst_19 = arith.constant dense<0.000000e+00> : vector<8x128xf32>
    %35 = tpu.matmul %32, %34, %cst_19 {dimension_numbers = #tpu.dot_dimension_numbers<[1], [0], [0], [1], [0, 0, 1, 1], [], []>} : vector<8x128xf32>, vector<128x128xf32>, vector<8x128xf32> -> vector<8x128xf32>
    %c0_20 = arith.constant 0 : index
    %c0_21 = arith.constant 0 : index
    %c0_22 = arith.constant 0 : index
    %36 = vector.load %arg6[%c0_20, %c0_21, %c0_22] : memref<2x1x128xf32, #tpu.memory_space<vmem>>, vector<1x1x128xf32>
    %37 = vector.shape_cast %36 : vector<1x1x128xf32> to vector<1x128xf32>
    %38 = vector.broadcast %37 : vector<1x128xf32> to vector<8x128xf32>
    %39 = arith.addf %35, %38 : vector<8x128xf32>
    %c0_23 = arith.constant 0 : index
    %c0_24 = arith.constant 0 : index
    %c0_25 = arith.constant 0 : index
    %40 = vector.load %arg7[%c0_23, %c0_24, %c0_25] : memref<2x1x128xf32, #tpu.memory_space<vmem>>, vector<1x1x128xf32>
    %41 = vector.shape_cast %40 : vector<1x1x128xf32> to vector<1x128xf32>
    %c0_26 = arith.constant 0 : index
    %c0_27 = arith.constant 0 : index
    %c0_28 = arith.constant 0 : index
    %42 = vector.load %arg8[%c0_26, %c0_27, %c0_28] : memref<2x1x128xf32, #tpu.memory_space<vmem>>, vector<1x1x128xf32>
    %43 = vector.shape_cast %42 : vector<1x1x128xf32> to vector<1x128xf32>
    %cst_29 = arith.constant dense<0.000000e+00> : vector<128xf32>
    %44 = vector.multi_reduction <add>, %39, %cst_29 [0] : vector<8x128xf32> to vector<128xf32>
    %45 = vector.shape_cast %44 : vector<128xf32> to vector<1x128xf32>
    %cst_30 = arith.constant 8.000000e+00 : f32
    %46 = vector.broadcast %cst_30 : f32 to vector<1x128xf32>
    %47 = arith.divf %45, %46 : vector<1x128xf32>
    %48 = arith.mulf %39, %39 : vector<8x128xf32>
    %cst_31 = arith.constant dense<0.000000e+00> : vector<128xf32>
    %49 = vector.multi_reduction <add>, %48, %cst_31 [0] : vector<8x128xf32> to vector<128xf32>
    %50 = vector.shape_cast %49 : vector<128xf32> to vector<1x128xf32>
    %cst_32 = arith.constant 8.000000e+00 : f32
    %51 = vector.broadcast %cst_32 : f32 to vector<1x128xf32>
    %52 = arith.divf %50, %51 : vector<1x128xf32>
    %53 = arith.mulf %47, %47 : vector<1x128xf32>
    %54 = arith.subf %52, %53 : vector<1x128xf32>
    %cst_33 = arith.constant 0.000000e+00 : f32
    %55 = vector.broadcast %cst_33 : f32 to vector<1x128xf32>
    %56 = arith.maximumf %54, %55 : vector<1x128xf32>
    %cst_34 = arith.constant 9.99999974E-6 : f32
    %57 = vector.broadcast %cst_34 : f32 to vector<1x128xf32>
    %58 = arith.addf %56, %57 : vector<1x128xf32>
    %59 = math.rsqrt %58 : vector<1x128xf32>
    %60 = arith.mulf %41, %59 : vector<1x128xf32>
    %61 = arith.mulf %47, %60 : vector<1x128xf32>
    %62 = arith.subf %43, %61 : vector<1x128xf32>
    %63 = vector.broadcast %60 : vector<1x128xf32> to vector<8x128xf32>
    %64 = arith.mulf %39, %63 : vector<8x128xf32>
    %65 = vector.broadcast %62 : vector<1x128xf32> to vector<8x128xf32>
    %66 = arith.addf %64, %65 : vector<8x128xf32>
    %cst_35 = arith.constant 0.000000e+00 : f32
    %67 = vector.broadcast %cst_35 : f32 to vector<8x128xf32>
    %68 = arith.maximumf %66, %67 : vector<8x128xf32>
    %c1 = arith.constant 1 : index
    %c0_36 = arith.constant 0 : index
    %c0_37 = arith.constant 0 : index
    %69 = vector.load %arg5[%c1, %c0_36, %c0_37] : memref<2x128x128xf32, #tpu.memory_space<vmem>>, vector<1x128x128xf32>
    %70 = vector.shape_cast %69 : vector<1x128x128xf32> to vector<128x128xf32>
    %cst_38 = arith.constant dense<0.000000e+00> : vector<8x128xf32>
    %71 = tpu.matmul %68, %70, %cst_38 {dimension_numbers = #tpu.dot_dimension_numbers<[1], [0], [0], [1], [0, 0, 1, 1], [], []>} : vector<8x128xf32>, vector<128x128xf32>, vector<8x128xf32> -> vector<8x128xf32>
    %c1_39 = arith.constant 1 : index
    %c0_40 = arith.constant 0 : index
    %c0_41 = arith.constant 0 : index
    %72 = vector.load %arg6[%c1_39, %c0_40, %c0_41] : memref<2x1x128xf32, #tpu.memory_space<vmem>>, vector<1x1x128xf32>
    %73 = vector.shape_cast %72 : vector<1x1x128xf32> to vector<1x128xf32>
    %74 = vector.broadcast %73 : vector<1x128xf32> to vector<8x128xf32>
    %75 = arith.addf %71, %74 : vector<8x128xf32>
    %c1_42 = arith.constant 1 : index
    %c0_43 = arith.constant 0 : index
    %c0_44 = arith.constant 0 : index
    %76 = vector.load %arg7[%c1_42, %c0_43, %c0_44] : memref<2x1x128xf32, #tpu.memory_space<vmem>>, vector<1x1x128xf32>
    %77 = vector.shape_cast %76 : vector<1x1x128xf32> to vector<1x128xf32>
    %c1_45 = arith.constant 1 : index
    %c0_46 = arith.constant 0 : index
    %c0_47 = arith.constant 0 : index
    %78 = vector.load %arg8[%c1_45, %c0_46, %c0_47] : memref<2x1x128xf32, #tpu.memory_space<vmem>>, vector<1x1x128xf32>
    %79 = vector.shape_cast %78 : vector<1x1x128xf32> to vector<1x128xf32>
    %cst_48 = arith.constant dense<0.000000e+00> : vector<128xf32>
    %80 = vector.multi_reduction <add>, %75, %cst_48 [0] : vector<8x128xf32> to vector<128xf32>
    %81 = vector.shape_cast %80 : vector<128xf32> to vector<1x128xf32>
    %cst_49 = arith.constant 8.000000e+00 : f32
    %82 = vector.broadcast %cst_49 : f32 to vector<1x128xf32>
    %83 = arith.divf %81, %82 : vector<1x128xf32>
    %84 = arith.mulf %75, %75 : vector<8x128xf32>
    %cst_50 = arith.constant dense<0.000000e+00> : vector<128xf32>
    %85 = vector.multi_reduction <add>, %84, %cst_50 [0] : vector<8x128xf32> to vector<128xf32>
    %86 = vector.shape_cast %85 : vector<128xf32> to vector<1x128xf32>
    %cst_51 = arith.constant 8.000000e+00 : f32
    %87 = vector.broadcast %cst_51 : f32 to vector<1x128xf32>
    %88 = arith.divf %86, %87 : vector<1x128xf32>
    %89 = arith.mulf %83, %83 : vector<1x128xf32>
    %90 = arith.subf %88, %89 : vector<1x128xf32>
    %cst_52 = arith.constant 0.000000e+00 : f32
    %91 = vector.broadcast %cst_52 : f32 to vector<1x128xf32>
    %92 = arith.maximumf %90, %91 : vector<1x128xf32>
    %cst_53 = arith.constant 9.99999974E-6 : f32
    %93 = vector.broadcast %cst_53 : f32 to vector<1x128xf32>
    %94 = arith.addf %92, %93 : vector<1x128xf32>
    %95 = math.rsqrt %94 : vector<1x128xf32>
    %96 = arith.mulf %77, %95 : vector<1x128xf32>
    %97 = arith.mulf %83, %96 : vector<1x128xf32>
    %98 = arith.subf %79, %97 : vector<1x128xf32>
    %99 = vector.broadcast %96 : vector<1x128xf32> to vector<8x128xf32>
    %100 = arith.mulf %75, %99 : vector<8x128xf32>
    %101 = vector.broadcast %98 : vector<1x128xf32> to vector<8x128xf32>
    %102 = arith.addf %100, %101 : vector<8x128xf32>
    %cst_54 = arith.constant 0.000000e+00 : f32
    %103 = vector.broadcast %cst_54 : f32 to vector<8x128xf32>
    %104 = arith.maximumf %102, %103 : vector<8x128xf32>
    %c0_55 = arith.constant 0 : index
    %c0_56 = arith.constant 0 : index
    %105 = vector.load %arg9[%c0_55, %c0_56] : memref<128x128xf32, #tpu.memory_space<vmem>>, vector<128x128xf32>
    %cst_57 = arith.constant dense<0.000000e+00> : vector<8x128xf32>
    %106 = tpu.matmul %104, %105, %cst_57 {dimension_numbers = #tpu.dot_dimension_numbers<[1], [0], [0], [1], [0, 0, 1, 1], [], []>} : vector<8x128xf32>, vector<128x128xf32>, vector<8x128xf32> -> vector<8x128xf32>
    %c0_58 = arith.constant 0 : index
    %c0_59 = arith.constant 0 : index
    %107 = vector.load %arg10[%c0_58, %c0_59] : memref<1x128xf32, #tpu.memory_space<vmem>>, vector<1x128xf32>
    %108 = vector.broadcast %107 : vector<1x128xf32> to vector<8x128xf32>
    %109 = arith.addf %106, %108 : vector<8x128xf32>
    %c0_60 = arith.constant 0 : index
    %c0_61 = arith.constant 0 : index
    %110 = vector.load %arg11[%c0_60, %c0_61] : memref<8x128xf32, #tpu.memory_space<vmem>>, vector<8x128xf32>
    tpu.vector_store %arg11[%c0_60, %c0_61], %109 {strides = array<i32>} : memref<8x128xf32, #tpu.memory_space<vmem>>, vector<8x128xf32>,
    return
  }
}

</mosaic_0001>

<llo_original>
// kernel: my_model_forward.1
$region0: #{my_model_forward.1}
  #allocation0 [shape = 'u32[]', space=smem, size = 0x4, offset = 0x4, fixed_abs, tag = 'smem constant byte address 0x4 - core index']
  #allocation1 [shape = 'u32[72,128]{1,0:T(1,128)}', space=vmem, size = 0x9000, scoped, tag = 'internal scratch']
  %s0 = inlined_call_operand.vmem [shape: f32[8,16], index: 0, kind: input, shape index: {}]
  %s1 = inlined_call_operand.hbm [shape: f32[16,128], index: 1, kind: input, shape index: {}]
  %s2 = inlined_call_operand.hbm [shape: f32[1,128], index: 2, kind: input, shape index: {}]
  %s3 = inlined_call_operand.vmem [shape: f32[1,128], index: 3, kind: input, shape index: {}]
  %s4 = inlined_call_operand.hbm [shape: f32[1,128], index: 4, kind: input, shape index: {}]
  %s5 = inlined_call_operand.hbm [shape: f32[2,128,128], index: 5, kind: input, shape index: {}]
  %s6 = inlined_call_operand.hbm [shape: f32[2,1,128], index: 6, kind: input, shape index: {}]
  %s7 = inlined_call_operand.hbm [shape: f32[2,1,128], index: 7, kind: input, shape index: {}]
  %s8 = inlined_call_operand.hbm [shape: f32[2,1,128], index: 8, kind: input, shape index: {}]
  %s9 = inlined_call_operand.hbm [shape: f32[128,128], index: 9, kind: input, shape index: {}]
  %s10 = inlined_call_operand.hbm [shape: f32[1,128], index: 10, kind: input, shape index: {}]
  %s11 = inlined_call_operand.vmem [shape: f32[8,128], index: 11, kind: output, shape index: {}]
  %s12 = sld [smem:[#allocation0]]
  $region90: #{my_model_forward.1} parent=0
    _
  %s14 = ssub.s32 1, %s12
  %s15 = scalar_select 0, %s14, %s12
  $region1: #{my_model_forward.1} parent=0
    #allocation2 [shape = 'u8[8192]{0}', space=vmem, size = 0x2000, scoped, tag = 'input window, operand 1, single buffered']
    #allocation3 [shape = 's32[1]{0}', space=sflag, size = 0x4, scoped, tag = 'scoped memory for my_model_forward.1']
    #allocation4 [shape = 'u8[512]{0}', space=vmem, size = 0x400, scoped, tag = 'input window, operand 2, single buffered']
    #allocation5 [shape = 's32[1]{0}', space=sflag, size = 0x4, scoped, tag = 'scoped memory for my_model_forward.1']
    #allocation6 [shape = 'u8[512]{0}', space=vmem, size = 0x400, scoped, tag = 'input window, operand 4, single buffered']
    #allocation7 [shape = 'u8[131072]{0}', space=vmem, size = 0x20000, scoped, tag = 'input window, operand 5, single buffered']
    #allocation8 [shape = 's32[1]{0}', space=sflag, size = 0x4, scoped, tag = 'scoped memory for my_model_forward.1']
    #allocation9 [shape = 'u8[1024]{0}', space=vmem, size = 0x400, scoped, tag = 'input window, operand 6, single buffered']
    #allocation10 [shape = 'u8[1024]{0}', space=vmem, size = 0x400, scoped, tag = 'input window, operand 7, single buffered']
    #allocation11 [shape = 's32[1]{0}', space=sflag, size = 0x4, scoped, tag = 'scoped memory for my_model_forward.1']
    #allocation12 [shape = 'u8[1024]{0}', space=vmem, size = 0x400, scoped, tag = 'input window, operand 8, single buffered']
    #allocation13 [shape = 'u8[65536]{0}', space=vmem, size = 0x10000, scoped, tag = 'input window, operand 9, single buffered']
    #allocation14 [shape = 's32[1]{0}', space=sflag, size = 0x4, scoped, tag = 'scoped memory for my_model_forward.1']
    #allocation15 [shape = 'u8[512]{0}', space=vmem, size = 0x400, scoped, tag = 'input window, operand 10, single buffered']
    %16 = vsyncpa [#allocation3], 0
    %17 = vsyncpa [#allocation5], 0
    %18 = vsyncpa [#allocation8], 0
    %19 = vsyncpa [#allocation11], 0
    %20 = vsyncpa [#allocation14], 0
    // Predicated region
    $region2: #{my_model_forward.1} parent=1 // pred_check
      _
    $region3: #{my_model_forward.1} parent=1 // pred_check_branch
      %22 = sbr.rel (0) target = $region5
    $region4: #{my_model_forward.1} parent=1 // pred_region
      _
    $region5: #{my_model_forward.1} parent=1 // pred_fallthru
      _
    // Predicated region
    $region6: #{my_model_forward.1} parent=1 // pred_check
      _
    $region7: #{my_model_forward.1} parent=1 // pred_check_branch
      %24 = sbr.rel (0) target = $region9
    $region8: #{my_model_forward.1} parent=1 // pred_region
      %26 = vsyncadd [#allocation3], 0
      %s27 = sshll.u32 %s1, 4
      %s28 = int_to_ptr.hbm [resolvable:$true] %s27
      %s29 = sshll.u32 [#allocation2], 4
      %s30 = int_to_ptr.vmem [resolvable:$true] %s29
      %35 = dma.hbm_to_vmem [thread:$0]  %s28, 256, %s30, [#allocation3], 128, 128, 8
    $region9: #{my_model_forward.1} parent=1 // pred_fallthru
      _
    // Predicated region
    $region10: #{my_model_forward.1} parent=1 // pred_check
      _
    $region11: #{my_model_forward.1} parent=1 // pred_check_branch
      %37 = sbr.rel (0) target = $region13
    $region12: #{my_model_forward.1} parent=1 // pred_region
      %39 = vsyncadd [#allocation5], 0
      %s41 = sshll.u32 %s2, 4
      %s42 = int_to_ptr.hbm [resolvable:$true] %s41
      %s43 = sshll.u32 [#allocation4], 4
      %s44 = int_to_ptr.vmem [resolvable:$true] %s43
      %46 = dma.hbm_to_vmem [thread:$0]  %s42, 16, %s44, [#allocation5]
    $region13: #{my_model_forward.1} parent=1 // pred_fallthru
      _
    // Predicated region
    $region14: #{my_model_forward.1} parent=1 // pred_check
      _
    $region15: #{my_model_forward.1} parent=1 // pred_check_branch
      %48 = sbr.rel (0) target = $region17
    $region16: #{my_model_forward.1} parent=1 // pred_region
      _
    $region17: #{my_model_forward.1} parent=1 // pred_fallthru
      _
    // Predicated region
    $region18: #{my_model_forward.1} parent=1 // pred_check
      _
    $region19: #{my_model_forward.1} parent=1 // pred_check_branch
      %50 = sbr.rel (0) target = $region21
    $region20: #{my_model_forward.1} parent=1 // pred_region
      %52 = vsyncadd [#allocation5], 0
      %s54 = sshll.u32 %s4, 4
      %s55 = int_to_ptr.hbm [resolvable:$true] %s54
      %s56 = sshll.u32 [#allocation6], 4
      %s57 = int_to_ptr.vmem [resolvable:$true] %s56
      %59 = dma.hbm_to_vmem [thread:$0]  %s55, 16, %s57, [#allocation5]
    $region21: #{my_model_forward.1} parent=1 // pred_fallthru
      _
    // Predicated region
    $region22: #{my_model_forward.1} parent=1 // pred_check
      _
    $region23: #{my_model_forward.1} parent=1 // pred_check_branch
      %61 = sbr.rel (0) target = $region25
    $region24: #{my_model_forward.1} parent=1 // pred_region
      %63 = vsyncadd [#allocation8], 0
      %s64 = sshll.u32 %s5, 4
      %s65 = int_to_ptr.hbm [resolvable:$true] %s64
      %s66 = sshll.u32 [#allocation7], 4
      %s67 = int_to_ptr.vmem [resolvable:$true] %s66
      %72 = dma.hbm_to_vmem [thread:$0]  %s65, 4096, %s67, [#allocation8], 128, 128, 8
    $region25: #{my_model_forward.1} parent=1 // pred_fallthru
      _
    // Predicated region
    $region26: #{my_model_forward.1} parent=1 // pred_check
      _
    $region27: #{my_model_forward.1} parent=1 // pred_check_branch
      %74 = sbr.rel (0) target = $region29
    $region28: #{my_model_forward.1} parent=1 // pred_region
      %76 = vsyncadd [#allocation8], 0
      %s77 = sshll.u32 %s6, 4
      %s78 = int_to_ptr.hbm [resolvable:$true] %s77
      %s79 = sshll.u32 [#allocation9], 4
      %s80 = int_to_ptr.vmem [resolvable:$true] %s79
      %85 = dma.hbm_to_vmem [thread:$0]  %s78, 32, %s80, [#allocation8], 16, 16, 1
    $region29: #{my_model_forward.1} parent=1 // pred_fallthru
      _
    // Predicated region
    $region30: #{my_model_forward.1} parent=1 // pred_check
      _
    $region31: #{my_model_forward.1} parent=1 // pred_check_branch
      %87 = sbr.rel (0) target = $region33
    $region32: #{my_model_forward.1} parent=1 // pred_region
      %89 = vsyncadd [#allocation11], 0
      %s90 = sshll.u32 %s7, 4
      %s91 = int_to_ptr.hbm [resolvable:$true] %s90
      %s92 = sshll.u32 [#allocation10], 4
      %s93 = int_to_ptr.vmem [resolvable:$true] %s92
      %98 = dma.hbm_to_vmem [thread:$0]  %s91, 32, %s93, [#allocation11], 16, 16, 1
    $region33: #{my_model_forward.1} parent=1 // pred_fallthru
      _
    // Predicated region
    $region34: #{my_model_forward.1} parent=1 // pred_check
      _
    $region35: #{my_model_forward.1} parent=1 // pred_check_branch
      %100 = sbr.rel (0) target = $region37
    $region36: #{my_model_forward.1} parent=1 // pred_region
      %102 = vsyncadd [#allocation11], 0
      %s103 = sshll.u32 %s8, 4
      %s104 = int_to_ptr.hbm [resolvable:$true] %s103
      %s105 = sshll.u32 [#allocation12], 4
      %s106 = int_to_ptr.vmem [resolvable:$true] %s105
      %111 = dma.hbm_to_vmem [thread:$0]  %s104, 32, %s106, [#allocation11], 16, 16, 1
    $region37: #{my_model_forward.1} parent=1 // pred_fallthru
      _
    // Predicated region
    $region38: #{my_model_forward.1} parent=1 // pred_check
      _
    $region39: #{my_model_forward.1} parent=1 // pred_check_branch
      %113 = sbr.rel (0) target = $region41
    $region40: #{my_model_forward.1} parent=1 // pred_region
      %115 = vsyncadd [#allocation14], 0
      %s116 = sshll.u32 %s9, 4
      %s117 = int_to_ptr.hbm [resolvable:$true] %s116
      %s118 = sshll.u32 [#allocation13], 4
      %s119 = int_to_ptr.vmem [resolvable:$true] %s118
      %124 = dma.hbm_to_vmem [thread:$0]  %s117, 2048, %s119, [#allocation14], 128, 128, 8
    $region41: #{my_model_forward.1} parent=1 // pred_fallthru
      _
    // Predicated region
    $region42: #{my_model_forward.1} parent=1 // pred_check
      _
    $region43: #{my_model_forward.1} parent=1 // pred_check_branch
      %126 = sbr.rel (0) target = $region45
    $region44: #{my_model_forward.1} parent=1 // pred_region
      %128 = vsyncadd [#allocation14], 0
      %s130 = sshll.u32 %s10, 4
      %s131 = int_to_ptr.hbm [resolvable:$true] %s130
      %s132 = sshll.u32 [#allocation15], 4
      %s133 = int_to_ptr.vmem [resolvable:$true] %s132
      %135 = dma.hbm_to_vmem [thread:$0]  %s131, 16, %s133, [#allocation14]
    $region45: #{my_model_forward.1} parent=1 // pred_fallthru
      _
    // Predicated region
    $region46: #{my_model_forward.1} parent=1 // pred_check
      _
    $region47: #{my_model_forward.1} parent=1 // pred_check_branch
      %137 = sbr.rel (0) target = $region49
    $region48: #{my_model_forward.1} parent=1 // pred_region
      %139 = dma.done [#allocation3], 256
    $region49: #{my_model_forward.1} parent=1 // pred_fallthru
      _
    // Predicated region
    $region50: #{my_model_forward.1} parent=1 // pred_check
      _
    $region51: #{my_model_forward.1} parent=1 // pred_check_branch
      %141 = sbr.rel (0) target = $region53
    $region52: #{my_model_forward.1} parent=1 // pred_region
      %143 = dma.done [#allocation5], 16
    $region53: #{my_model_forward.1} parent=1 // pred_fallthru
      _
    // Predicated region
    $region54: #{my_model_forward.1} parent=1 // pred_check
      _
    $region55: #{my_model_forward.1} parent=1 // pred_check_branch
      %145 = sbr.rel (0) target = $region57
    $region56: #{my_model_forward.1} parent=1 // pred_region
      %147 = dma.done [#allocation5], 16
    $region57: #{my_model_forward.1} parent=1 // pred_fallthru
      _
    // Predicated region
    $region58: #{my_model_forward.1} parent=1 // pred_check
      _
    $region59: #{my_model_forward.1} parent=1 // pred_check_branch
      %149 = sbr.rel (0) target = $region61
    $region60: #{my_model_forward.1} parent=1 // pred_region
      %151 = dma.done [#allocation8], 4096
    $region61: #{my_model_forward.1} parent=1 // pred_fallthru
      _
    // Predicated region
    $region62: #{my_model_forward.1} parent=1 // pred_check
      _
    $region63: #{my_model_forward.1} parent=1 // pred_check_branch
      %153 = sbr.rel (0) target = $region65
    $region64: #{my_model_forward.1} parent=1 // pred_region
      %155 = dma.done [#allocation8], 32
    $region65: #{my_model_forward.1} parent=1 // pred_fallthru
      _
    // Predicated region
    $region66: #{my_model_forward.1} parent=1 // pred_check
      _
    $region67: #{my_model_forward.1} parent=1 // pred_check_branch
      %157 = sbr.rel (0) target = $region69
    $region68: #{my_model_forward.1} parent=1 // pred_region
      %159 = dma.done [#allocation11], 32
    $region69: #{my_model_forward.1} parent=1 // pred_fallthru
      _
    // Predicated region
    $region70: #{my_model_forward.1} parent=1 // pred_check
      _
    $region71: #{my_model_forward.1} parent=1 // pred_check_branch
      %161 = sbr.rel (0) target = $region73
    $region72: #{my_model_forward.1} parent=1 // pred_region
      %163 = dma.done [#allocation11], 32
    $region73: #{my_model_forward.1} parent=1 // pred_fallthru
      _
    // Predicated region
    $region74: #{my_model_forward.1} parent=1 // pred_check
      _
    $region75: #{my_model_forward.1} parent=1 // pred_check_branch
      %165 = sbr.rel (0) target = $region77
    $region76: #{my_model_forward.1} parent=1 // pred_region
      %167 = dma.done [#allocation14], 2048
    $region77: #{my_model_forward.1} parent=1 // pred_fallthru
      _
    // Predicated region
    $region78: #{my_model_forward.1} parent=1 // pred_check
      _
    $region79: #{my_model_forward.1} parent=1 // pred_check_branch
      %169 = sbr.rel (0) target = $region81
    $region80: #{my_model_forward.1} parent=1 // pred_region
      %171 = dma.done [#allocation14], 16
    $region81: #{my_model_forward.1} parent=1 // pred_fallthru
      _
    %v172 = vld [vmem:[%s0] sm:$0xff]
    %v173 = vld [vmem:[#allocation2] sm:$0xff]
    %v174 = vld [vmem:[#allocation2 + $0x8] sm:$0xff]
    %v175 = vld [vmem:[#allocation4] sm:$0x1]
    %v177 = vperm.slane %v175, 0
    %vm179 = vcmask 130048
    %v181 = vsel %vm179, %v172, 0
    %183 = vmatpush.msra.mxu0 0.0
    %184 = vmatpush.msra.mxu0 0.0
    %185 = vmatpush.msra.mxu0 0.0
    %186 = vmatpush.msra.mxu0 0.0
    %187 = vmatpush.msra.mxu0 0.0
    %188 = vmatpush.msra.mxu0 0.0
    %189 = vmatpush.msra.mxu0 0.0
    %190 = vmatpush.msra.mxu0 0.0
    %191 = vmatpush.msra.mxu0 0.0
    %192 = vmatpush.msra.mxu0 0.0
    %193 = vmatpush.msra.mxu0 0.0
    %194 = vmatpush.msra.mxu0 0.0
    %195 = vmatpush.msra.mxu0 0.0
    %196 = vmatpush.msra.mxu0 0.0
    %197 = vmatpush.msra.mxu0 %v174
    %198 = vmatpush.msra.mxu0 %v173
    %199 = vmatmul.f32.gmra.mxu0 %v181
    %v200 = vpop.f32.mrf.mxu0
    %v201 = vadd.f32 %v177, %v200
    %202 = vdwg.mxu0
    %v203 = vld [vmem:[%s3] sm:$0x1]
    %v204 = vld [vmem:[#allocation6] sm:$0x1]
    %v205 = vrot.slane %v201, 4
    %v206 = vadd.f32 %v201, %v205
    %v207 = vrot.slane %v206, 2
    %v208 = vadd.f32 %v206, %v207
    %v209 = vrot.slane %v208, 1
    %v210 = vadd.f32 %v208, %v209
    %v211 = vrcp.pop 8.0
    %v212 = vmul.f32 8.0, %v211
    %v213 = vsub.f32 1.0, %v212
    %v214 = vmul.f32 %v211, %v213
    %v215 = vadd.f32 %v211, %v214
    %vm216 = vweird.f32 %v211
    %v217 = vsel %vm216, %v211, %v215
    %v218 = vmul.f32 %v210, %v217
    %v219 = vmul.f32 %v201, %v201
    %v220 = vrot.slane %v219, 4
    %v221 = vadd.f32 %v219, %v220
    %v222 = vrot.slane %v221, 2
    %v223 = vadd.f32 %v221, %v222
    %v224 = vrot.slane %v223, 1
    %v225 = vadd.f32 %v223, %v224
    %v226 = vmul.f32 %v225, %v217
    %v227 = vmul.f32 %v218, %v218
    %v228 = vsub.f32 %v226, %v227
    %v229 = vmax.f32 %v228, 0.0
    %v230 = vadd.f32 %v229, 1e-05
    %v231 = vrsqrt.pop %v230
    %v232 = vmul.f32 %v231, %v230
    %v233 = vmul.f32 %v232, %v231
    %v234 = vmul.f32 0.5, %v233
    %v235 = vsub.f32 1.5, %v234
    %v236 = vmul.f32 %v231, %v235
    %vm237 = vweird.f32 %v230
    %vm238 = vweird.f32 %v231
    %vm239 = vmor %vm237, %vm238
    %v240 = vsel %vm239, %v231, %v236
    %v241 = vmul.f32 %v203, %v240
    %v242 = vmul.f32 %v218, %v241
    %v243 = vsub.f32 %v204, %v242
    %v245 = vperm.slane %v241, 0
    %v247 = vmul.f32 %v201, %v245
    %v249 = vperm.slane %v243, 0
    %v251 = vadd.f32 %v247, %v249
    %v252 = vmax.f32 %v251, 0.0
    %v253 = vld [vmem:[#allocation7] sm:$0xff]
    %v254 = vld [vmem:[#allocation7 + $0x8] sm:$0xff]
    %v255 = vld [vmem:[#allocation7 + $0x10] sm:$0xff]
    %v256 = vld [vmem:[#allocation7 + $0x18] sm:$0xff]
    %v257 = vld [vmem:[#allocation7 + $0x20] sm:$0xff]
    %v258 = vld [vmem:[#allocation7 + $0x28] sm:$0xff]
    %v259 = vld [vmem:[#allocation7 + $0x30] sm:$0xff]
    %v260 = vld [vmem:[#allocation7 + $0x38] sm:$0xff]
    %v261 = vld [vmem:[#allocation7 + $0x40] sm:$0xff]
    %v262 = vld [vmem:[#allocation7 + $0x48] sm:$0xff]
    %v263 = vld [vmem:[#allocation7 + $0x50] sm:$0xff]
    %v264 = vld [vmem:[#allocation7 + $0x58] sm:$0xff]
    %v265 = vld [vmem:[#allocation7 + $0x60] sm:$0xff]
    %v266 = vld [vmem:[#allocation7 + $0x68] sm:$0xff]
    %v267 = vld [vmem:[#allocation7 + $0x70] sm:$0xff]
    %v268 = vld [vmem:[#allocation7 + $0x78] sm:$0xff]
    %v269 = vld [vmem:[#allocation9] sm:$0x1]
    %v271 = vperm.slane %v269, 0
    %273 = vmatpush.msra.mxu0 %v268
    %274 = vmatpush.msra.mxu0 %v267
    %275 = vmatpush.msra.mxu0 %v266
    %276 = vmatpush.msra.mxu0 %v265
    %277 = vmatpush.msra.mxu0 %v264
    %278 = vmatpush.msra.mxu0 %v263
    %279 = vmatpush.msra.mxu0 %v262
    %280 = vmatpush.msra.mxu0 %v261
    %281 = vmatpush.msra.mxu0 %v260
    %282 = vmatpush.msra.mxu0 %v259
    %283 = vmatpush.msra.mxu0 %v258
    %284 = vmatpush.msra.mxu0 %v257
    %285 = vmatpush.msra.mxu0 %v256
    %286 = vmatpush.msra.mxu0 %v255
    %287 = vmatpush.msra.mxu0 %v254
    %288 = vmatpush.msra.mxu0 %v253
    %289 = vmatmul.f32.gmra.mxu0 %v252
    %v290 = vpop.f32.mrf.mxu0
    %v291 = vadd.f32 %v271, %v290
    %292 = vdwg.mxu0
    %v293 = vld [vmem:[#allocation10] sm:$0x1]
    %v294 = vld [vmem:[#allocation12] sm:$0x1]
    %v295 = vrot.slane %v291, 4
    %v296 = vadd.f32 %v291, %v295
    %v297 = vrot.slane %v296, 2
    %v298 = vadd.f32 %v296, %v297
    %v299 = vrot.slane %v298, 1
    %v300 = vadd.f32 %v298, %v299
    %v301 = vmul.f32 %v300, %v217
    %v302 = vmul.f32 %v291, %v291
    %v303 = vrot.slane %v302, 4
    %v304 = vadd.f32 %v302, %v303
    %v305 = vrot.slane %v304, 2
    %v306 = vadd.f32 %v304, %v305
    %v307 = vrot.slane %v306, 1
    %v308 = vadd.f32 %v306, %v307
    %v309 = vmul.f32 %v308, %v217
    %v310 = vmul.f32 %v301, %v301
    %v311 = vsub.f32 %v309, %v310
    %v312 = vmax.f32 %v311, 0.0
    %v313 = vadd.f32 %v312, 1e-05
    %v314 = vrsqrt.pop %v313
    %v315 = vmul.f32 %v314, %v313
    %v316 = vmul.f32 %v315, %v314
    %v317 = vmul.f32 0.5, %v316
    %v318 = vsub.f32 1.5, %v317
    %v319 = vmul.f32 %v314, %v318
    %vm320 = vweird.f32 %v313
    %vm321 = vweird.f32 %v314
    %vm322 = vmor %vm320, %vm321
    %v323 = vsel %vm322, %v314, %v319
    %v324 = vmul.f32 %v293, %v323
    %v325 = vmul.f32 %v301, %v324
    %v326 = vsub.f32 %v294, %v325
    %v328 = vperm.slane %v324, 0
    %v330 = vmul.f32 %v291, %v328
    %v332 = vperm.slane %v326, 0
    %v334 = vadd.f32 %v330, %v332
    %v335 = vmax.f32 %v334, 0.0
    %s336 = scalar_lea.vmem [#allocation7], 128
    %v337 = vld [vmem:[%s336] sm:$0xff]
    %v338 = vld [vmem:[%s336 + $0x8] sm:$0xff]
    %v339 = vld [vmem:[%s336 + $0x10] sm:$0xff]
    %v340 = vld [vmem:[%s336 + $0x18] sm:$0xff]
    %v341 = vld [vmem:[%s336 + $0x20] sm:$0xff]
    %v342 = vld [vmem:[%s336 + $0x28] sm:$0xff]
    %v343 = vld [vmem:[%s336 + $0x30] sm:$0xff]
    %v344 = vld [vmem:[%s336 + $0x38] sm:$0xff]
    %v345 = vld [vmem:[%s336 + $0x40] sm:$0xff]
    %v346 = vld [vmem:[%s336 + $0x48] sm:$0xff]
    %v347 = vld [vmem:[%s336 + $0x50] sm:$0xff]
    %v348 = vld [vmem:[%s336 + $0x58] sm:$0xff]
    %v349 = vld [vmem:[%s336 + $0x60] sm:$0xff]
    %v350 = vld [vmem:[%s336 + $0x68] sm:$0xff]
    %v351 = vld [vmem:[%s336 + $0x70] sm:$0xff]
    %v352 = vld [vmem:[%s336 + $0x78] sm:$0xff]
    %s353 = scalar_lea.vmem [#allocation9], 1
    %v354 = vld [vmem:[%s353] sm:$0x1]
    %v356 = vperm.slane %v354, 0
    %358 = vmatpush.msra.mxu0 %v352
    %359 = vmatpush.msra.mxu0 %v351
    %360 = vmatpush.msra.mxu0 %v350
    %361 = vmatpush.msra.mxu0 %v349
    %362 = vmatpush.msra.mxu0 %v348
    %363 = vmatpush.msra.mxu0 %v347
    %364 = vmatpush.msra.mxu0 %v346
    %365 = vmatpush.msra.mxu0 %v345
    %366 = vmatpush.msra.mxu0 %v344
    %367 = vmatpush.msra.mxu0 %v343
    %368 = vmatpush.msra.mxu0 %v342
    %369 = vmatpush.msra.mxu0 %v341
    %370 = vmatpush.msra.mxu0 %v340
    %371 = vmatpush.msra.mxu0 %v339
    %372 = vmatpush.msra.mxu0 %v338
    %373 = vmatpush.msra.mxu0 %v337
    %374 = vmatmul.f32.gmra.mxu0 %v335
    %v375 = vpop.f32.mrf.mxu0
    %v376 = vadd.f32 %v356, %v375
    %377 = vdwg.mxu0
    %s378 = scalar_lea.vmem [#allocation10], 1
    %v379 = vld [vmem:[%s378] sm:$0x1]
    %s380 = scalar_lea.vmem [#allocation12], 1
    %v381 = vld [vmem:[%s380] sm:$0x1]
    %v382 = vrot.slane %v376, 4
    %v383 = vadd.f32 %v376, %v382
    %v384 = vrot.slane %v383, 2
    %v385 = vadd.f32 %v383, %v384
    %v386 = vrot.slane %v385, 1
    %v387 = vadd.f32 %v385, %v386
    %v388 = vmul.f32 %v387, %v217
    %v389 = vmul.f32 %v376, %v376
    %v390 = vrot.slane %v389, 4
    %v391 = vadd.f32 %v389, %v390
    %v392 = vrot.slane %v391, 2
    %v393 = vadd.f32 %v391, %v392
    %v394 = vrot.slane %v393, 1
    %v395 = vadd.f32 %v393, %v394
    %v396 = vmul.f32 %v395, %v217
    %v397 = vmul.f32 %v388, %v388
    %v398 = vsub.f32 %v396, %v397
    %v399 = vmax.f32 %v398, 0.0
    %v400 = vadd.f32 %v399, 1e-05
    %v401 = vrsqrt.pop %v400
    %v402 = vmul.f32 %v401, %v400
    %v403 = vmul.f32 %v402, %v401
    %v404 = vmul.f32 0.5, %v403
    %v405 = vsub.f32 1.5, %v404
    %v406 = vmul.f32 %v401, %v405
    %vm407 = vweird.f32 %v400
    %vm408 = vweird.f32 %v401
    %vm409 = vmor %vm407, %vm408
    %v410 = vsel %vm409, %v401, %v406
    %v411 = vmul.f32 %v379, %v410
    %v412 = vmul.f32 %v388, %v411
    %v413 = vsub.f32 %v381, %v412
    %v415 = vperm.slane %v411, 0
    %v417 = vmul.f32 %v376, %v415
    %v419 = vperm.slane %v413, 0
    %v421 = vadd.f32 %v417, %v419
    %v422 = vmax.f32 %v421, 0.0
    %v423 = vld [vmem:[#allocation13] sm:$0xff]
    %v424 = vld [vmem:[#allocation13 + $0x8] sm:$0xff]
    %v425 = vld [vmem:[#allocation13 + $0x10] sm:$0xff]
    %v426 = vld [vmem:[#allocation13 + $0x18] sm:$0xff]
    %v427 = vld [vmem:[#allocation13 + $0x20] sm:$0xff]
    %v428 = vld [vmem:[#allocation13 + $0x28] sm:$0xff]
    %v429 = vld [vmem:[#allocation13 + $0x30] sm:$0xff]
    %v430 = vld [vmem:[#allocation13 + $0x38] sm:$0xff]
    %v431 = vld [vmem:[#allocation13 + $0x40] sm:$0xff]
    %v432 = vld [vmem:[#allocation13 + $0x48] sm:$0xff]
    %v433 = vld [vmem:[#allocation13 + $0x50] sm:$0xff]
    %v434 = vld [vmem:[#allocation13 + $0x58] sm:$0xff]
    %v435 = vld [vmem:[#allocation13 + $0x60] sm:$0xff]
    %v436 = vld [vmem:[#allocation13 + $0x68] sm:$0xff]
    %v437 = vld [vmem:[#allocation13 + $0x70] sm:$0xff]
    %v438 = vld [vmem:[#allocation13 + $0x78] sm:$0xff]
    %v439 = vld [vmem:[#allocation15] sm:$0x1]
    %v441 = vperm.slane %v439, 0
    %443 = vmatpush.msra.mxu0 %v438
    %444 = vmatpush.msra.mxu0 %v437
    %445 = vmatpush.msra.mxu0 %v436
    %446 = vmatpush.msra.mxu0 %v435
    %447 = vmatpush.msra.mxu0 %v434
    %448 = vmatpush.msra.mxu0 %v433
    %449 = vmatpush.msra.mxu0 %v432
    %450 = vmatpush.msra.mxu0 %v431
    %451 = vmatpush.msra.mxu0 %v430
    %452 = vmatpush.msra.mxu0 %v429
    %453 = vmatpush.msra.mxu0 %v428
    %454 = vmatpush.msra.mxu0 %v427
    %455 = vmatpush.msra.mxu0 %v426
    %456 = vmatpush.msra.mxu0 %v425
    %457 = vmatpush.msra.mxu0 %v424
    %458 = vmatpush.msra.mxu0 %v423
    %459 = vmatmul.f32.gmra.mxu0 %v422
    %v460 = vpop.f32.mrf.mxu0
    %v461 = vadd.f32 %v441, %v460
    %462 = vdwg.mxu0
    %463 = vst [vmem:[%s11] sm:$0xff] %v461
    // Predicated region
    $region82: #{my_model_forward.1} parent=1 // pred_check
      _
    $region83: #{my_model_forward.1} parent=1 // pred_check_branch
      %465 = sbr.rel (0) target = $region85
    $region84: #{my_model_forward.1} parent=1 // pred_region
      _
    $region85: #{my_model_forward.1} parent=1 // pred_fallthru
      _
    // Predicated region
    $region86: #{my_model_forward.1} parent=1 // pred_check
      _
    $region87: #{my_model_forward.1} parent=1 // pred_check_branch
      %467 = sbr.rel (0) target = $region89
    $region88: #{my_model_forward.1} parent=1 // pred_region
      _
    $region89: #{my_model_forward.1} parent=1 // pred_fallthru
      _
    %468 = vsyncpa [#allocation3], 1
    %469 = vsyncpa [#allocation5], 1
    %470 = vsyncpa [#allocation8], 1
    %471 = vsyncpa [#allocation11], 1
    %472 = vsyncpa [#allocation14], 1

</llo_original>
